<compile_context>
chip_gen: v6e
topology: v6e:2x2x1
jax: 0.10.0
libtpu: 0.0.40
codegen_flags: <defaults>
</compile_context>

<pallas_src>
import numpy as np
import jax
import jax.numpy as jnp
from jax.experimental import pallas as pl
from jax.experimental.pallas import tpu as pltpu


# ----------------------------------------------------------------------------
# Deterministic parameter construction (CEMnet.__init__ equivalent, host numpy)
# ----------------------------------------------------------------------------
def _cubic(x):
    ax = np.abs(x)
    return np.where(
        ax <= 1.0, 1.5 * ax ** 3 - 2.5 * ax ** 2 + 1.0,
        np.where(ax < 2.0, -0.5 * ax ** 3 + 2.5 * ax ** 2 - 4.0 * ax + 2.0, 0.0))


def make_ds_kernel_1d(s):
    """1D factor of the separable bicubic-antialias downscale-by-s kernel (sums to 1)."""
    offs = np.arange(-2 * s, 2 * s + 1, dtype=np.float64)
    k1d = _cubic(offs / s) / s
    return k1d / k1d.sum()


def _conv2_full(a, b):
    ha, wa = a.shape
    hb, wb = b.shape
    out = np.zeros((ha + hb - 1, wa + wb - 1), dtype=np.float64)
    for i in range(hb):
        for j in range(wb):
            out[i:i + ha, j:j + wa] += b[i, j] * a
    return out


def compute_inv_hTh(ds_kernel, s, nfft_add=36, lower_magnitude_bound=0.1, crop_half=6):
    """CEMnet.compute_inv_hTh: (h * h~) * s^2, aliased downsample, FFT-domain inverse."""
    hTh = _conv2_full(ds_kernel, np.rot90(ds_kernel, 2)) * s ** 2
    pre = ((hTh.shape[0] - 1) // 2) % s            # phase that keeps the central tap
    hTh = hTh[pre::s, pre::s]
    pad = nfft_add // 2
    hTh_fft = np.fft.fft2(np.pad(hTh, ((pad, pad), (pad, pad))))
    mag = np.maximum(np.abs(hTh_fft), 1e-12)
    hTh_fft = hTh_fft * np.maximum(1.0, lower_magnitude_bound / mag)
    inv = np.real(np.fft.ifft2(1.0 / hTh_fft))
    r, c = np.unravel_index(np.argmax(inv), inv.shape)
    half = int(min(crop_half, r, c, inv.shape[0] - 1 - r, inv.shape[1] - 1 - c))
    # TODO(synk): the conf-driven validity-margin / energy-portion cropping of
    # inv_hTh (Return_Invalid_Margin_Size_in_LR) is replaced by a fixed centered crop.
    return inv[r - half:r + half + 1, c - half:c + half + 1]


def calc_strides(s):
    """Deterministic phase split used by the aliased up/down sampling ops."""
    pre = (s - 1) // 2
    post = s - 1 - pre
    return pre, post


# ----------------------------------------------------------------------------
# Host-side composition of the per-axis linear operators
# ----------------------------------------------------------------------------
def _pad_matrix(n, p):
    """(n+2p, n): edge-replication pad along one axis."""
    M = np.zeros((n + 2 * p, n))
    M[np.arange(n + 2 * p), np.clip(np.arange(-p, n + p), 0, n - 1)] = 1.0
    return M


def _corr_matrix(k, n_in):
    """(n_in-m+1, n_in): valid 1D cross-correlation (Conv2d semantics) with taps k."""
    k = np.asarray(k, np.float64)
    m = k.shape[0]
    n_out = n_in - m + 1
    M = np.zeros((n_out, n_in))
    rows = np.arange(n_out)
    for j in range(m):
        M[rows, rows + j] = k[j]
    return M


def _stuff_matrix(n, s, pre):
    """(s*n, n): zero-stuff upsample, original sample lands at phase `pre`."""
    M = np.zeros((s * n, n))
    M[np.arange(n) * s + pre, np.arange(n)] = 1.0
    return M


def _select_matrix(n_in, s, pre):
    """(n_in//s, n_in): strided phase selection (aliased downsample)."""
    n_out = n_in // s
    M = np.zeros((n_out, n_in))
    M[np.arange(n_out), np.arange(n_out) * s + pre] = 1.0
    return M


def _build_operators(inv_hTh, k1d, s, pre, h, w):
    """Fold the pad / conv / zero-stuff / phase-select chains into per-axis matrices.

    Returns (Lc, Lr, Mc, Mr) with shapes (R, s*h, h), (R, s*w, w), (R, s*h, s*h),
    (R, s*w, s*w) such that per channel-image X (h x w), gen G (s*h x s*w):
        ortho_2_NS_HR  = sum_r Lc[r] @ X @ Lr[r]^T
        ortho_2_NS_gen = sum_r Mc[r] @ G @ Mr[r]^T
    """
    la = k1d.shape[0]               # 4s+1
    pa = la // 2                    # antialiasing replication-pad size
    li = inv_hTh.shape[0]           # odd
    pi = li // 2                    # inv_hTh replication-pad size
    up1d = s * k1d                  # 1D factor of upscale_antialiasing (= ds_kernel*s^2)
    dn1d = k1d[::-1]                # 1D factor of downscale_antialiasing (= rot90(ds,2))

    def upscale_mat(n):             # zero-stuff -> edge pad -> valid corr : (s*n, n)
        return (_corr_matrix(up1d, s * n + 2 * pa)
                @ _pad_matrix(s * n, pa) @ _stuff_matrix(n, s, pre))

    def downscale_mat(n_hr):        # edge pad -> valid corr -> phase select : (n_hr/s, n_hr)
        return (_select_matrix(n_hr, s, pre)
                @ _corr_matrix(dn1d, n_hr + 2 * pa) @ _pad_matrix(n_hr, pa))

    # inv_hTh = sum_r outer(ucol[r], vrow[r])  (exact up to fp64 SVD round-off)
    U, S, Vt = np.linalg.svd(np.asarray(inv_hTh, np.float64))
    keep = S > (S[0] * 1e-7)
    keep[0] = True
    ucol = (U[:, keep] * S[keep][None, :]).T      # (R, li) column(H)-axis kernels
    vrow = Vt[keep, :]                            # (R, li) row(W)-axis kernels
    R = ucol.shape[0]

    Uc, Ur = upscale_mat(h), upscale_mat(w)            # (s*h, h), (s*w, w)
    Dc, Dr = downscale_mat(s * h), downscale_mat(s * w)  # (h, s*h), (w, s*w)
    Ph, Pw = _pad_matrix(h, pi), _pad_matrix(w, pi)

    Lc = np.stack([Uc @ _corr_matrix(ucol[r], h + 2 * pi) @ Ph for r in range(R)])
    Lr = np.stack([Ur @ _corr_matrix(vrow[r], w + 2 * pi) @ Pw for r in range(R)])
    Mc = Lc @ Dc                                   # (R, s*h, s*h)
    Mr = Lr @ Dr                                   # (R, s*w, s*w)
    return Lc, Lr, Mc, Mr


# ----------------------------------------------------------------------------
# The single fused Pallas kernel
# ----------------------------------------------------------------------------
def _cem_kernel(R, sigmoid_range_limit, range_span):
    def kernel(lc_ref, lrT_ref, mc_ref, mrT_ref, x_ref, g_ref, o_ref):
        x = x_ref[0].astype(jnp.float32)           # (h, wx)    LR channel-image(s)
        g = g_ref[0].astype(jnp.float32)           # (sh, wg)   generator output
        acc_x = jnp.zeros(o_ref.shape[1:], jnp.float32)
        acc_g = jnp.zeros(o_ref.shape[1:], jnp.float32)
        for r in range(R):                         # statically unrolled; R = rank of inv_hTh
            acc_x = acc_x + jnp.dot(
                lc_ref[r],
                jnp.dot(x, lrT_ref[r], preferred_element_type=jnp.float32),
                preferred_element_type=jnp.float32)
            acc_g = acc_g + jnp.dot(
                mc_ref[r],
                jnp.dot(g, mrT_ref[r], preferred_element_type=jnp.float32),
                preferred_element_type=jnp.float32)
        ns = g - acc_g                             # NS_HR_component
        if sigmoid_range_limit:
            ns = jnp.tanh(ns) * range_span
        o_ref[0] = (acc_x + ns).astype(o_ref.dtype)    # ortho_2_NS_HR + NS component
    return kernel


def _cem_pallas_call(xf, gf, Lc, LrT, Mc, MrT, sigmoid_range_limit, range_span):
    """xf: (N, h, wx) LR channel-image stack; gf: (N, sh, wg) HR generator stack."""
    N, h, wx = xf.shape
    _, sh, wg = gf.shape
    R = Lc.shape[0]
    const = lambda a: pl.BlockSpec(a.shape, lambda n: (0, 0, 0))   # resident operators
    return pl.pallas_call(
        _cem_kernel(R, sigmoid_range_limit, range_span),
        out_shape=jax.ShapeDtypeStruct((N, sh, wg), gf.dtype),
        grid=(N,),
        in_specs=[const(Lc), const(LrT), const(Mc), const(MrT),
                  pl.BlockSpec((1, h, wx), lambda n: (n, 0, 0)),
                  pl.BlockSpec((1, sh, wg), lambda n: (n, 0, 0))],
        out_specs=pl.BlockSpec((1, sh, wg), lambda n: (n, 0, 0)),
        compiler_params=pltpu.CompilerParams(dimension_semantics=("parallel",)),
    )(Lc, LrT, Mc, MrT, xf, gf)


# ----------------------------------------------------------------------------
# CEM module equivalent
# ----------------------------------------------------------------------------
class CEMPallas:
    def __init__(self, s=2, sigmoid_range_limit=False, input_range=(0.0, 1.0)):
        self.s = int(s)
        self.k1d64 = make_ds_kernel_1d(self.s)
        ds64 = np.outer(self.k1d64, self.k1d64)
        self.ds_kernel = ds64.astype(np.float32)
        self.inv_hTh64 = compute_inv_hTh(ds64, self.s)
        self.inv_hTh = self.inv_hTh64.astype(np.float32)
        self.downscale_antialiasing = np.ascontiguousarray(np.rot90(ds64, 2)).astype(np.float32)
        self.upscale_antialiasing = (ds64 * self.s ** 2).astype(np.float32)
        self.pre_stride, self.post_stride = calc_strides(self.s)
        self.sigmoid_range_limit = bool(sigmoid_range_limit)
        self.range_span = float(input_range[1] - input_range[0])
        # Pack all B*C channel-images along the lane axis (single lane-dense block)
        # while B*C*s*W stays at/below this; otherwise per-channel "parallel" grid.
        # TODO(synk): for very large resolutions the resident operator matrices should
        # be strip-tiled (they are banded); not needed at these test sizes.
        self.wide_lane_limit = 256
        self._op_cache = {}

    def generated_image_model(self, x):
        # TODO(synk): the wrapped generator is an external nn.Module supplied at
        # construction; a deterministic nearest-neighbour x s upsampler stands in.
        return jnp.repeat(jnp.repeat(x, self.s, axis=2), self.s, axis=3)

    def _operators(self, h, w, n_packed):
        key = (h, w, n_packed)
        if key not in self._op_cache:
            Lc, Lr, Mc, Mr = _build_operators(self.inv_hTh64, self.k1d64,
                                              self.s, self.pre_stride, h, w)
            LrT = np.transpose(Lr, (0, 2, 1))
            MrT = np.transpose(Mr, (0, 2, 1))
            if n_packed > 1:     # block-diagonal right operators for lane-packed channels
                eye = np.eye(n_packed)
                LrT = np.stack([np.kron(eye, LrT[r]) for r in range(LrT.shape[0])])
                MrT = np.stack([np.kron(eye, MrT[r]) for r in range(MrT.shape[0])])
            self._op_cache[key] = tuple(jnp.asarray(m.astype(np.float32))
                                        for m in (Lc, LrT, Mc, MrT))
        return self._op_cache[key]

    def __call__(self, x):
        # CEM.forward with pre_pad=False, return_2_components=False
        gen = self.generated_image_model(x)
        x3 = x[:, -3:, :, :]
        B, C, h, w = x3.shape
        s = self.s
        sh, sw = s * h, s * w
        assert gen.shape[2] % s == 0 and gen.shape[3] % s == 0
        N = B * C
        wide = (N * sw) <= self.wide_lane_limit
        Lc, LrT, Mc, MrT = self._operators(h, w, N if wide else 1)
        if wide:
            # Channels packed along the lane (last) axis -> one lane-dense block.
            xf = jnp.transpose(x3, (2, 0, 1, 3)).reshape(1, h, N * w)
            gf = jnp.transpose(gen, (2, 0, 1, 3)).reshape(1, sh, N * sw)
            out = _cem_pallas_call(xf, gf, Lc, LrT, Mc, MrT,
                                   self.sigmoid_range_limit, self.range_span)
            return jnp.transpose(out.reshape(sh, B, C, sw), (1, 2, 0, 3))
        xf = x3.reshape(N, h, w)
        gf = gen.reshape(N, sh, sw)
        out = _cem_pallas_call(xf, gf, Lc, LrT, Mc, MrT,
                               self.sigmoid_range_limit, self.range_span)
        return out.reshape(B, C, sh, sw)


# ----------------------------------------------------------------------------
# Pure-JAX reference (lax.conv, stage-by-stage like the PyTorch module)
# ----------------------------------------------------------------------------
def aliased_upscale(x, s, pre):
    B, C, h, w = x.shape
    z = jnp.zeros((B, C, h, s, w, s), x.dtype)
    z = z.at[:, :, :, pre, :, pre].set(x)
    return z.reshape(B, C, h * s, w * s)


def aliased_downscale(x, s, pre):
    B, C, H, W = x.shape
    assert H % s == 0 and W % s == 0
    return x.reshape(B, C, H // s, s, W // s, s)[:, :, :, pre, :, pre]


def _ref_depthwise(x, filt):
    B, C, H, W = x.shape
    kh, kw = filt.shape
    xp = jnp.pad(x, ((0, 0), (0, 0), (kh // 2, kh // 2), (kw // 2, kw // 2)), mode='edge')
    w = jnp.asarray(np.tile(np.asarray(filt, np.float32)[None, None], (C, 1, 1, 1)))
    return jax.lax.conv_general_dilated(
        xp, w, (1, 1), 'VALID',
        dimension_numbers=('NCHW', 'OIHW', 'NCHW'), feature_group_count=C)


def ref_forward(cem, x):
    gen = cem.generated_image_model(x)
    x3 = x[:, -3:, :, :]
    up = lambda t: _ref_depthwise(aliased_upscale(t, cem.s, cem.pre_stride),
                                  cem.upscale_antialiasing)
    down = lambda t: aliased_downscale(_ref_depthwise(t, cem.downscale_antialiasing),
                                       cem.s, cem.pre_stride)
    ortho_x = up(_ref_depthwise(x3, cem.inv_hTh))
    ortho_gen = up(_ref_depthwise(down(gen), cem.inv_hTh))
    ns = gen - ortho_gen
    if cem.sigmoid_range_limit:
        ns = jnp.tanh(ns) * cem.range_span
    return ortho_x + ns


if __name__ == "__main__":
    key = jax.random.PRNGKey(0)
    B, C, h, w, s = 2, 3, 16, 16, 2
    x = jax.random.normal(key, (B, C, h, w), dtype=jnp.float32)

    # lane-packed (wide) path
    cem = CEMPallas(s=s, sigmoid_range_limit=False)
    out = jax.block_until_ready(cem(x))
    assert out.shape == (B, C, s * h, s * w), out.shape
    ref = jax.block_until_ready(ref_forward(cem, x))
    np.testing.assert_allclose(np.asarray(out), np.asarray(ref), rtol=2e-3, atol=2e-3)

    # per-channel grid path (used for larger images) + tanh range-limit branch
    cem2 = CEMPallas(s=s, sigmoid_range_limit=True)
    cem2.wide_lane_limit = 0
    out2 = jax.block_until_ready(cem2(x))
    ref2 = jax.block_until_ready(ref_forward(cem2, x))
    np.testing.assert_allclose(np.asarray(out2), np.asarray(ref2), rtol=2e-3, atol=2e-3)

    print("KERNEL_OK")
</pallas_src>

<mosaic_0001>
module attributes {stable_mosaic.version = 11 : i64} {
  func.func @kernel(%arg0: i32, %arg1: memref<1x32x16xf32, #tpu.memory_space<vmem>>, %arg2: memref<1x96x192xf32, #tpu.memory_space<vmem>>, %arg3: memref<1x32x32xf32, #tpu.memory_space<vmem>>, %arg4: memref<1x192x192xf32, #tpu.memory_space<vmem>>, %arg5: memref<1x16x96xf32, #tpu.memory_space<vmem>>, %arg6: memref<1x32x192xf32, #tpu.memory_space<vmem>>, %arg7: memref<1x32x192xf32, #tpu.memory_space<vmem>>) attributes {dimension_semantics = [#tpu.dimension_semantics<parallel>], iteration_bounds = array<i64: 1>, scalar_prefetch = 0 : i64, scratch_operands = 0 : i64, tpu.core_type = #tpu.core_type<tc>, window_params = [{pipeline_mode = #tpu.pipeline_mode<synchronous>, transform_indices = @transform_0, window_bounds = array<i64: 1, 32, 16>}, {pipeline_mode = #tpu.pipeline_mode<synchronous>, transform_indices = @transform_1, window_bounds = array<i64: 1, 96, 192>}, {pipeline_mode = #tpu.pipeline_mode<synchronous>, transform_indices = @transform_2, window_bounds = array<i64: 1, 32, 32>}, {pipeline_mode = #tpu.pipeline_mode<synchronous>, transform_indices = @transform_3, window_bounds = array<i64: 1, 192, 192>}, {transform_indices = @transform_4, window_bounds = array<i64: 1, 16, 96>}, {transform_indices = @transform_5, window_bounds = array<i64: 1, 32, 192>}, {transform_indices = @transform_6, window_bounds = array<i64: 1, 32, 192>}]} {
    %c0 = arith.constant 0 : index
    %c0_0 = arith.constant 0 : index
    %c0_1 = arith.constant 0 : index
    %0 = vector.load %arg5[%c0, %c0_0, %c0_1] : memref<1x16x96xf32, #tpu.memory_space<vmem>>, vector<1x16x96xf32>
    %1 = vector.shape_cast %0 : vector<1x16x96xf32> to vector<16x96xf32>
    %c0_2 = arith.constant 0 : index
    %c0_3 = arith.constant 0 : index
    %c0_4 = arith.constant 0 : index
    %2 = vector.load %arg6[%c0_2, %c0_3, %c0_4] : memref<1x32x192xf32, #tpu.memory_space<vmem>>, vector<1x32x192xf32>
    %3 = vector.shape_cast %2 : vector<1x32x192xf32> to vector<32x192xf32>
    %cst = arith.constant 0.000000e+00 : f32
    %4 = vector.broadcast %cst : f32 to vector<32x192xf32>
    %cst_5 = arith.constant 0.000000e+00 : f32
    %5 = vector.broadcast %cst_5 : f32 to vector<32x192xf32>
    %c0_6 = arith.constant 0 : index
    %c0_7 = arith.constant 0 : index
    %c0_8 = arith.constant 0 : index
    %6 = vector.load %arg1[%c0_6, %c0_7, %c0_8] : memref<1x32x16xf32, #tpu.memory_space<vmem>>, vector<1x32x16xf32>
    %7 = vector.shape_cast %6 : vector<1x32x16xf32> to vector<32x16xf32>
    %c0_9 = arith.constant 0 : index
    %c0_10 = arith.constant 0 : index
    %c0_11 = arith.constant 0 : index
    %8 = vector.load %arg2[%c0_9, %c0_10, %c0_11] : memref<1x96x192xf32, #tpu.memory_space<vmem>>, vector<1x96x192xf32>
    %9 = vector.shape_cast %8 : vector<1x96x192xf32> to vector<96x192xf32>
    %cst_12 = arith.constant dense<0.000000e+00> : vector<16x192xf32>
    %10 = tpu.matmul %1, %9, %cst_12 {dimension_numbers = #tpu.dot_dimension_numbers<[1], [0], [0], [1], [0, 0, 1, 1], [], []>} : vector<16x96xf32>, vector<96x192xf32>, vector<16x192xf32> -> vector<16x192xf32>
    %cst_13 = arith.constant dense<0.000000e+00> : vector<32x192xf32>
    %11 = tpu.matmul %7, %10, %cst_13 {dimension_numbers = #tpu.dot_dimension_numbers<[1], [0], [0], [1], [0, 0, 1, 1], [], []>} : vector<32x16xf32>, vector<16x192xf32>, vector<32x192xf32> -> vector<32x192xf32>
    %12 = arith.addf %4, %11 : vector<32x192xf32>
    %c0_14 = arith.constant 0 : index
    %c0_15 = arith.constant 0 : index
    %c0_16 = arith.constant 0 : index
    %13 = vector.load %arg3[%c0_14, %c0_15, %c0_16] : memref<1x32x32xf32, #tpu.memory_space<vmem>>, vector<1x32x32xf32>
    %14 = vector.shape_cast %13 : vector<1x32x32xf32> to vector<32x32xf32>
    %c0_17 = arith.constant 0 : index
    %c0_18 = arith.constant 0 : index
    %c0_19 = arith.constant 0 : index
    %15 = vector.load %arg4[%c0_17, %c0_18, %c0_19] : memref<1x192x192xf32, #tpu.memory_space<vmem>>, vector<1x192x192xf32>
    %16 = vector.shape_cast %15 : vector<1x192x192xf32> to vector<192x192xf32>
    %cst_20 = arith.constant dense<0.000000e+00> : vector<32x192xf32>
    %17 = tpu.matmul %3, %16, %cst_20 {dimension_numbers = #tpu.dot_dimension_numbers<[1], [0], [0], [1], [0, 0, 1, 1], [], []>} : vector<32x192xf32>, vector<192x192xf32>, vector<32x192xf32> -> vector<32x192xf32>
    %cst_21 = arith.constant dense<0.000000e+00> : vector<32x192xf32>
    %18 = tpu.matmul %14, %17, %cst_21 {dimension_numbers = #tpu.dot_dimension_numbers<[1], [0], [0], [1], [0, 0, 1, 1], [], []>} : vector<32x32xf32>, vector<32x192xf32>, vector<32x192xf32> -> vector<32x192xf32>
    %19 = arith.addf %5, %18 : vector<32x192xf32>
    %20 = arith.subf %3, %19 : vector<32x192xf32>
    %21 = arith.addf %12, %20 : vector<32x192xf32>
    %c0_22 = arith.constant 0 : index
    %c0_23 = arith.constant 0 : index
    %c0_24 = arith.constant 0 : index
    %22 = vector.load %arg7[%c0_22, %c0_23, %c0_24] : memref<1x32x192xf32, #tpu.memory_space<vmem>>, vector<1x32x192xf32>
    %23 = vector.shape_cast %22 : vector<1x32x192xf32> to vector<32x192xf32>
    %24 = vector.shape_cast %21 : vector<32x192xf32> to vector<1x32x192xf32>
    tpu.vector_store %arg7[%c0_22, %c0_23, %c0_24], %24 {strides = array<i32>} : memref<1x32x192xf32, #tpu.memory_space<vmem>>, vector<1x32x192xf32>,
    return
  }
  func.func @transform_0(%arg0: i32) -> (i32, i32, i32) {
    %c0_i32 = arith.constant 0 : i32
    %c0_i32_0 = arith.constant 0 : i32
    %c0_i32_1 = arith.constant 0 : i32
    %c0_i32_2 = arith.constant 0 : i32
    return %c0_i32, %c0_i32_0, %c0_i32_1 : i32, i32, i32
  }
  func.func @transform_1(%arg0: i32) -> (i32, i32, i32) {
    %c0_i32 = arith.constant 0 : i32
    %c0_i32_0 = arith.constant 0 : i32
    %c0_i32_1 = arith.constant 0 : i32
    %c0_i32_2 = arith.constant 0 : i32
    return %c0_i32, %c0_i32_0, %c0_i32_1 : i32, i32, i32
  }
  func.func @transform_2(%arg0: i32) -> (i32, i32, i32) {
    %c0_i32 = arith.constant 0 : i32
    %c0_i32_0 = arith.constant 0 : i32
    %c0_i32_1 = arith.constant 0 : i32
    %c0_i32_2 = arith.constant 0 : i32
    return %c0_i32, %c0_i32_0, %c0_i32_1 : i32, i32, i32
  }
  func.func @transform_3(%arg0: i32) -> (i32, i32, i32) {
    %c0_i32 = arith.constant 0 : i32
    %c0_i32_0 = arith.constant 0 : i32
    %c0_i32_1 = arith.constant 0 : i32
    %c0_i32_2 = arith.constant 0 : i32
    return %c0_i32, %c0_i32_0, %c0_i32_1 : i32, i32, i32
  }
  func.func @transform_4(%arg0: i32) -> (i32, i32, i32) {
    %c0_i32 = arith.constant 0 : i32
    %c0_i32_0 = arith.constant 0 : i32
    %c0_i32_1 = arith.constant 0 : i32
    return %arg0, %c0_i32, %c0_i32_0 : i32, i32, i32
  }
  func.func @transform_5(%arg0: i32) -> (i32, i32, i32) {
    %c0_i32 = arith.constant 0 : i32
    %c0_i32_0 = arith.constant 0 : i32
    %c0_i32_1 = arith.constant 0 : i32
    return %arg0, %c0_i32, %c0_i32_0 : i32, i32, i32
  }
  func.func @transform_6(%arg0: i32) -> (i32, i32, i32) {
    %c0_i32 = arith.constant 0 : i32
    %c0_i32_0 = arith.constant 0 : i32
    %c0_i32_1 = arith.constant 0 : i32
    return %arg0, %c0_i32, %c0_i32_0 : i32, i32, i32
  }
}

</mosaic_0001>

<llo_original>
// kernel: tpu_custom_call.1
$region0: #{tpu_custom_call.1}
  #allocation0 [shape = 'u32[]', space=smem, size = 0x4, offset = 0x4, fixed_abs, tag = 'smem constant byte address 0x4 - core index']
  #allocation1 [shape = 'u32[144,128]{1,0:T(1,128)}', space=vmem, size = 0x12000, scoped, tag = 'internal scratch']
  %s0 = inlined_call_operand.vmem [shape: f32[1,32,16], index: 0, kind: input, shape index: {}]
  %s1 = inlined_call_operand.hbm [shape: f32[1,96,192], index: 1, kind: input, shape index: {}]
  %s2 = inlined_call_operand.vmem [shape: f32[1,32,32], index: 2, kind: input, shape index: {}]
  %s3 = inlined_call_operand.hbm [shape: f32[1,192,192], index: 3, kind: input, shape index: {}]
  %s4 = inlined_call_operand.vmem [shape: f32[1,16,96], index: 4, kind: input, shape index: {}]
  %s5 = inlined_call_operand.hbm [shape: f32[1,32,192], index: 5, kind: input, shape index: {}]
  %s6 = inlined_call_operand.hbm [shape: f32[1,32,192], index: 6, kind: output, shape index: {}]
  %s7 = sld [smem:[#allocation0]]
  $region46: #{tpu_custom_call.1} parent=0
    _
  %s9 = ssub.s32 1, %s7
  %s10 = scalar_select 0, %s9, %s7
  $region1: #{tpu_custom_call.1} parent=0
    #allocation2 [shape = 'u8[98304]{0}', space=vmem, size = 0x18000, scoped, tag = 'input window, operand 1, single buffered']
    #allocation3 [shape = 's32[1]{0}', space=sflag, size = 0x4, scoped, tag = 'scoped memory for tpu_custom_call.1']
    #allocation4 [shape = 's32[1]{0}', space=sflag, size = 0x4, scoped, tag = 'scoped memory for tpu_custom_call.1']
    #allocation5 [shape = 'u8[196608]{0}', space=vmem, size = 0x30000, scoped, tag = 'input window, operand 3, single buffered']
    #allocation6 [shape = 's32[1]{0}', space=sflag, size = 0x4, scoped, tag = 'scoped memory for tpu_custom_call.1']
    #allocation7 [shape = 'u8[32768]{0}', space=vmem, size = 0x8000, scoped, tag = 'input window, operand 5, single buffered']
    #allocation8 [shape = 'u8[32768]{0}', space=vmem, size = 0x8000, scoped, tag = 'output window, operand 0, single buffered']
    %11 = vsyncpa [#allocation3], 0
    %12 = vsyncpa [#allocation6], 0
    %13 = vsyncpa [#allocation4], 0
    // Predicated region
    $region2: #{tpu_custom_call.1} parent=1 // pred_check
      _
    $region3: #{tpu_custom_call.1} parent=1 // pred_check_branch
      %15 = sbr.rel (0) target = $region5
    $region4: #{tpu_custom_call.1} parent=1 // pred_region
      _
    $region5: #{tpu_custom_call.1} parent=1 // pred_fallthru
      _
    // Predicated region
    $region6: #{tpu_custom_call.1} parent=1 // pred_check
      _
    $region7: #{tpu_custom_call.1} parent=1 // pred_check_branch
      %17 = sbr.rel (0) target = $region9
    $region8: #{tpu_custom_call.1} parent=1 // pred_region
      %s19 = ssub.s32 3072, 3072
      %20 = vsyncadd [#allocation3], %s19
      %s21 = sshll.u32 [#allocation2], 4
      %s22 = int_to_ptr.vmem [resolvable:$true] %s21
      %27 = dma.hbm_to_vmem [thread:$0]  %s1, 3072, %s22, [#allocation3], 256, 256, 16
    $region9: #{tpu_custom_call.1} parent=1 // pred_fallthru
      _
    // Predicated region
    $region10: #{tpu_custom_call.1} parent=1 // pred_check
      _
    $region11: #{tpu_custom_call.1} parent=1 // pred_check_branch
      %29 = sbr.rel (0) target = $region13
    $region12: #{tpu_custom_call.1} parent=1 // pred_region
      _
    $region13: #{tpu_custom_call.1} parent=1 // pred_fallthru
      _
    // Predicated region
    $region14: #{tpu_custom_call.1} parent=1 // pred_check
      _
    $region15: #{tpu_custom_call.1} parent=1 // pred_check_branch
      %31 = sbr.rel (0) target = $region17
    $region16: #{tpu_custom_call.1} parent=1 // pred_region
      %s33 = ssub.s32 6144, 6144
      %34 = vsyncadd [#allocation6], %s33
      %s35 = sshll.u32 [#allocation5], 4
      %s36 = int_to_ptr.vmem [resolvable:$true] %s35
      %41 = dma.hbm_to_vmem [thread:$0]  %s3, 6144, %s36, [#allocation6], 256, 256, 16
    $region17: #{tpu_custom_call.1} parent=1 // pred_fallthru
      _
    // Predicated region
    $region18: #{tpu_custom_call.1} parent=1 // pred_check
      _
    $region19: #{tpu_custom_call.1} parent=1 // pred_check_branch
      %43 = sbr.rel (0) target = $region21
    $region20: #{tpu_custom_call.1} parent=1 // pred_region
      _
    $region21: #{tpu_custom_call.1} parent=1 // pred_fallthru
      _
    // Predicated region
    $region22: #{tpu_custom_call.1} parent=1 // pred_check
      _
    $region23: #{tpu_custom_call.1} parent=1 // pred_check_branch
      %45 = sbr.rel (0) target = $region25
    $region24: #{tpu_custom_call.1} parent=1 // pred_region
      %s47 = ssub.s32 1024, 1024
      %48 = vsyncadd [#allocation6], %s47
      %s49 = sshll.u32 [#allocation7], 4
      %s50 = int_to_ptr.vmem [resolvable:$true] %s49
      %55 = dma.hbm_to_vmem [thread:$0]  %s5, 1024, %s50, [#allocation6], 256, 256, 16
    $region25: #{tpu_custom_call.1} parent=1 // pred_fallthru
      _
    // Predicated region
    $region26: #{tpu_custom_call.1} parent=1 // pred_check
      _
    $region27: #{tpu_custom_call.1} parent=1 // pred_check_branch
      %57 = sbr.rel (0) target = $region29
    $region28: #{tpu_custom_call.1} parent=1 // pred_region
      %58 = dma.done [#allocation3], 3072
    $region29: #{tpu_custom_call.1} parent=1 // pred_fallthru
      _
    // Predicated region
    $region30: #{tpu_custom_call.1} parent=1 // pred_check
      _
    $region31: #{tpu_custom_call.1} parent=1 // pred_check_branch
      %60 = sbr.rel (0) target = $region33
    $region32: #{tpu_custom_call.1} parent=1 // pred_region
      %61 = dma.done [#allocation6], 6144
    $region33: #{tpu_custom_call.1} parent=1 // pred_fallthru
      _
    // Predicated region
    $region34: #{tpu_custom_call.1} parent=1 // pred_check
      _
    $region35: #{tpu_custom_call.1} parent=1 // pred_check_branch
      %63 = sbr.rel (0) target = $region37
    $region36: #{tpu_custom_call.1} parent=1 // pred_region
      %64 = dma.done [#allocation6], 1024
    $region37: #{tpu_custom_call.1} parent=1 // pred_fallthru
      _
    %v65 = vld [vmem:[%s4] sm:$0xff]
    %v66 = vld [vmem:[%s4 + $0x8] sm:$0xff]
    %v67 = vld [vmem:[#allocation7] sm:$0xff]
    %v68 = vld [vmem:[#allocation7 + $0x8] sm:$0xff]
    %v69 = vld [vmem:[#allocation7 + $0x10] sm:$0xff]
    %v70 = vld [vmem:[#allocation7 + $0x18] sm:$0xff]
    %v71 = vld [vmem:[#allocation7 + $0x20] sm:$0xff]
    %v72 = vld [vmem:[#allocation7 + $0x28] sm:$0xff]
    %v73 = vld [vmem:[#allocation7 + $0x30] sm:$0xff]
    %v74 = vld [vmem:[#allocation7 + $0x38] sm:$0xff]
    %v75 = vld [vmem:[%s0] sm:$0xff]
    %v76 = vld [vmem:[%s0 + $0x8] sm:$0xff]
    %v77 = vld [vmem:[%s0 + $0x10] sm:$0xff]
    %v78 = vld [vmem:[%s0 + $0x18] sm:$0xff]
    %v79 = vld [vmem:[#allocation2] sm:$0xff]
    %v80 = vld [vmem:[#allocation2 + $0x8] sm:$0xff]
    %v81 = vld [vmem:[#allocation2 + $0x10] sm:$0xff]
    %v82 = vld [vmem:[#allocation2 + $0x18] sm:$0xff]
    %v83 = vld [vmem:[#allocation2 + $0x20] sm:$0xff]
    %v84 = vld [vmem:[#allocation2 + $0x28] sm:$0xff]
    %v85 = vld [vmem:[#allocation2 + $0x30] sm:$0xff]
    %v86 = vld [vmem:[#allocation2 + $0x38] sm:$0xff]
    %v87 = vld [vmem:[#allocation2 + $0x40] sm:$0xff]
    %v88 = vld [vmem:[#allocation2 + $0x48] sm:$0xff]
    %v89 = vld [vmem:[#allocation2 + $0x50] sm:$0xff]
    %v90 = vld [vmem:[#allocation2 + $0x58] sm:$0xff]
    %v91 = vld [vmem:[#allocation2 + $0x60] sm:$0xff]
    %v92 = vld [vmem:[#allocation2 + $0x68] sm:$0xff]
    %v93 = vld [vmem:[#allocation2 + $0x70] sm:$0xff]
    %v94 = vld [vmem:[#allocation2 + $0x78] sm:$0xff]
    %v95 = vld [vmem:[#allocation2 + $0x80] sm:$0xff]
    %v96 = vld [vmem:[#allocation2 + $0x88] sm:$0xff]
    %v97 = vld [vmem:[#allocation2 + $0x90] sm:$0xff]
    %v98 = vld [vmem:[#allocation2 + $0x98] sm:$0xff]
    %v99 = vld [vmem:[#allocation2 + $0xa0] sm:$0xff]
    %v100 = vld [vmem:[#allocation2 + $0xa8] sm:$0xff]
    %v101 = vld [vmem:[#allocation2 + $0xb0] sm:$0xff]
    %v102 = vld [vmem:[#allocation2 + $0xb8] sm:$0xff]
    %vm103 = vcmask 785408
    %v105 = vsel %vm103, %v65, 0
    %v108 = vsel %vm103, %v66, 0
    %110 = vmatprep.subr.mxu0 0.0
    %111 = vmatpush1.msra.mxu0 0.0
    %112 = vmatprep.subr.mxu0 0.0
    %113 = vmatpush1.msra.mxu0 0.0
    %114 = vmatprep.subr.mxu0 0.0
    %115 = vmatpush1.msra.mxu0 0.0
    %116 = vmatprep.subr.mxu0 0.0
    %117 = vmatpush1.msra.mxu0 0.0
    %118 = vmatprep.subr.mxu0 %v102
    %119 = vmatpush1.msra.mxu0 %v101
    %120 = vmatprep.subr.mxu0 %v100
    %121 = vmatpush1.msra.mxu0 %v99
    %122 = vmatprep.subr.mxu0 %v98
    %123 = vmatpush1.msra.mxu0 %v97
    %124 = vmatprep.subr.mxu0 %v96
    %125 = vmatpush1.msra.mxu0 %v95
    %126 = vmatprep.subr.mxu0 %v94
    %127 = vmatpush1.msra.mxu0 %v93
    %128 = vmatprep.subr.mxu0 %v92
    %129 = vmatpush1.msra.mxu0 %v91
    %130 = vmatprep.subr.mxu0 %v90
    %131 = vmatpush1.msra.mxu0 %v89
    %132 = vmatprep.subr.mxu0 %v88
    %133 = vmatpush1.msra.mxu0 %v87
    %134 = vmatprep.subr.mxu0 %v86
    %135 = vmatpush1.msra.mxu0 %v85
    %136 = vmatprep.subr.mxu0 %v84
    %137 = vmatpush1.msra.mxu0 %v83
    %138 = vmatprep.subr.mxu0 %v82
    %139 = vmatpush1.msra.mxu0 %v81
    %140 = vmatprep.subr.mxu0 %v80
    %141 = vmatpush1.msra.mxu0 %v79
    %142 = vmatprep.subr.mxu0 0.0
    %143 = vmatpush2.msra.mxu0 0.0
    %144 = vmatprep.subr.mxu0 0.0
    %145 = vmatpush2.msra.mxu0 0.0
    %146 = vmatprep.subr.mxu0 0.0
    %147 = vmatpush2.msra.mxu0 0.0
    %148 = vmatprep.subr.mxu0 0.0
    %149 = vmatpush2.msra.mxu0 0.0
    %150 = vmatprep.subr.mxu0 0.0
    %151 = vmatpush2.msra.mxu0 0.0
    %152 = vmatprep.subr.mxu0 0.0
    %153 = vmatpush2.msra.mxu0 0.0
    %154 = vmatprep.subr.mxu0 0.0
    %155 = vmatpush2.msra.mxu0 0.0
    %156 = vmatprep.subr.mxu0 0.0
    %157 = vmatpush2.msra.mxu0 0.0
    %158 = vmatprep.subr.mxu0 0.0
    %159 = vmatpush2.msra.mxu0 0.0
    %160 = vmatprep.subr.mxu0 0.0
    %161 = vmatpush2.msra.mxu0 0.0
    %162 = vmatprep.subr.mxu0 0.0
    %163 = vmatpush2.msra.mxu0 0.0
    %164 = vmatprep.subr.mxu0 0.0
    %165 = vmatpush2.msra.mxu0 0.0
    %166 = vmatprep.subr.mxu0 0.0
    %167 = vmatpush2.msra.mxu0 0.0
    %168 = vmatprep.subr.mxu0 0.0
    %169 = vmatpush2.msra.mxu0 0.0
    %170 = vmatprep.subr.mxu0 0.0
    %171 = vmatpush2.msra.mxu0 0.0
    %172 = vmatprep.subr.mxu0 0.0
    %173 = vmatpush2.msra.mxu0 0.0
    %174 = vmatprep.mubr.f32.mxu0 0.0
    %175 = vmatmul.mubr.f32.gmra.mxu0 %v105
    %v176 = vpop.f32.mrf.mxu0
    %v177 = vadd.f32 0.0, %v176
    %v178 = vpop.f32.mrf.mxu0
    %v179 = vadd.f32 0.0, %v178
    %180 = vmatprep.mubr.f32.mxu0 0.0
    %181 = vmatmul.mubr.f32.gmra.mxu0 %v108
    %v182 = vpop.f32.mrf.mxu0
    %v183 = vadd.f32 0.0, %v182
    %v184 = vpop.f32.mrf.mxu0
    %v185 = vadd.f32 0.0, %v184
    %186 = vdwg.mxu0
    %v187 = vld [vmem:[%s2] sm:$0xff]
    %v188 = vld [vmem:[%s2 + $0x8] sm:$0xff]
    %v189 = vld [vmem:[%s2 + $0x10] sm:$0xff]
    %v190 = vld [vmem:[%s2 + $0x18] sm:$0xff]
    %v191 = vld [vmem:[#allocation5] sm:$0xff]
    %v192 = vld [vmem:[#allocation5 + $0x8] sm:$0xff]
    %v193 = vld [vmem:[#allocation5 + $0x10] sm:$0xff]
    %v194 = vld [vmem:[#allocation5 + $0x18] sm:$0xff]
    %v195 = vld [vmem:[#allocation5 + $0x20] sm:$0xff]
    %v196 = vld [vmem:[#allocation5 + $0x28] sm:$0xff]
    %v197 = vld [vmem:[#allocation5 + $0x30] sm:$0xff]
    %v198 = vld [vmem:[#allocation5 + $0x38] sm:$0xff]
    %v199 = vld [vmem:[#allocation5 + $0x40] sm:$0xff]
    %v200 = vld [vmem:[#allocation5 + $0x48] sm:$0xff]
    %v201 = vld [vmem:[#allocation5 + $0x50] sm:$0xff]
    %v202 = vld [vmem:[#allocation5 + $0x58] sm:$0xff]
    %v203 = vld [vmem:[#allocation5 + $0x60] sm:$0xff]
    %v204 = vld [vmem:[#allocation5 + $0x68] sm:$0xff]
    %v205 = vld [vmem:[#allocation5 + $0x70] sm:$0xff]
    %v206 = vld [vmem:[#allocation5 + $0x78] sm:$0xff]
    %v207 = vld [vmem:[#allocation5 + $0x80] sm:$0xff]
    %v208 = vld [vmem:[#allocation5 + $0x88] sm:$0xff]
    %v209 = vld [vmem:[#allocation5 + $0x90] sm:$0xff]
    %v210 = vld [vmem:[#allocation5 + $0x98] sm:$0xff]
    %v211 = vld [vmem:[#allocation5 + $0xa0] sm:$0xff]
    %v212 = vld [vmem:[#allocation5 + $0xa8] sm:$0xff]
    %v213 = vld [vmem:[#allocation5 + $0xb0] sm:$0xff]
    %v214 = vld [vmem:[#allocation5 + $0xb8] sm:$0xff]
    %v215 = vld [vmem:[#allocation5 + $0xc0] sm:$0xff]
    %v216 = vld [vmem:[#allocation5 + $0xc8] sm:$0xff]
    %v217 = vld [vmem:[#allocation5 + $0xd0] sm:$0xff]
    %v218 = vld [vmem:[#allocation5 + $0xd8] sm:$0xff]
    %v219 = vld [vmem:[#allocation5 + $0xe0] sm:$0xff]
    %v220 = vld [vmem:[#allocation5 + $0xe8] sm:$0xff]
    %v221 = vld [vmem:[#allocation5 + $0xf0] sm:$0xff]
    %v222 = vld [vmem:[#allocation5 + $0xf8] sm:$0xff]
    %v223 = vld [vmem:[#allocation5 + $0x100] sm:$0xff]
    %v224 = vld [vmem:[#allocation5 + $0x108] sm:$0xff]
    %v225 = vld [vmem:[#allocation5 + $0x110] sm:$0xff]
    %v226 = vld [vmem:[#allocation5 + $0x118] sm:$0xff]
    %v227 = vld [vmem:[#allocation5 + $0x120] sm:$0xff]
    %v228 = vld [vmem:[#allocation5 + $0x128] sm:$0xff]
    %v229 = vld [vmem:[#allocation5 + $0x130] sm:$0xff]
    %v230 = vld [vmem:[#allocation5 + $0x138] sm:$0xff]
    %v231 = vld [vmem:[#allocation5 + $0x140] sm:$0xff]
    %v232 = vld [vmem:[#allocation5 + $0x148] sm:$0xff]
    %v233 = vld [vmem:[#allocation5 + $0x150] sm:$0xff]
    %v234 = vld [vmem:[#allocation5 + $0x158] sm:$0xff]
    %v235 = vld [vmem:[#allocation5 + $0x160] sm:$0xff]
    %v236 = vld [vmem:[#allocation5 + $0x168] sm:$0xff]
    %v237 = vld [vmem:[#allocation5 + $0x170] sm:$0xff]
    %v238 = vld [vmem:[#allocation5 + $0x178] sm:$0xff]
    %vm239 = vcmask 523264
    %v241 = vsel %vm239, %v68, 0
    %v244 = vsel %vm239, %v70, 0
    %v247 = vsel %vm239, %v72, 0
    %v250 = vsel %vm239, %v74, 0
    %252 = vmatprep.subr.mxu0 %v222
    %253 = vmatpush1.msra.mxu0 %v221
    %254 = vmatprep.subr.mxu0 %v220
    %255 = vmatpush1.msra.mxu0 %v219
    %256 = vmatprep.subr.mxu0 %v218
    %257 = vmatpush1.msra.mxu0 %v217
    %258 = vmatprep.subr.mxu0 %v216
    %259 = vmatpush1.msra.mxu0 %v215
    %260 = vmatprep.subr.mxu0 %v214
    %261 = vmatpush1.msra.mxu0 %v213
    %262 = vmatprep.subr.mxu0 %v212
    %263 = vmatpush1.msra.mxu0 %v211
    %264 = vmatprep.subr.mxu0 %v210
    %265 = vmatpush1.msra.mxu0 %v209
    %266 = vmatprep.subr.mxu0 %v208
    %267 = vmatpush1.msra.mxu0 %v207
    %268 = vmatprep.subr.mxu0 %v206
    %269 = vmatpush1.msra.mxu0 %v205
    %270 = vmatprep.subr.mxu0 %v204
    %271 = vmatpush1.msra.mxu0 %v203
    %272 = vmatprep.subr.mxu0 %v202
    %273 = vmatpush1.msra.mxu0 %v201
    %274 = vmatprep.subr.mxu0 %v200
    %275 = vmatpush1.msra.mxu0 %v199
    %276 = vmatprep.subr.mxu0 %v198
    %277 = vmatpush1.msra.mxu0 %v197
    %278 = vmatprep.subr.mxu0 %v196
    %279 = vmatpush1.msra.mxu0 %v195
    %280 = vmatprep.subr.mxu0 %v194
    %281 = vmatpush1.msra.mxu0 %v193
    %282 = vmatprep.subr.mxu0 %v192
    %283 = vmatpush1.msra.mxu0 %v191
    %284 = vmatprep.subr.mxu0 0.0
    %285 = vmatpush2.msra.mxu0 0.0
    %286 = vmatprep.subr.mxu0 0.0
    %287 = vmatpush2.msra.mxu0 0.0
    %288 = vmatprep.subr.mxu0 0.0
    %289 = vmatpush2.msra.mxu0 0.0
    %290 = vmatprep.subr.mxu0 0.0
    %291 = vmatpush2.msra.mxu0 0.0
    %292 = vmatprep.subr.mxu0 0.0
    %293 = vmatpush2.msra.mxu0 0.0
    %294 = vmatprep.subr.mxu0 0.0
    %295 = vmatpush2.msra.mxu0 0.0
    %296 = vmatprep.subr.mxu0 0.0
    %297 = vmatpush2.msra.mxu0 0.0
    %298 = vmatprep.subr.mxu0 0.0
    %299 = vmatpush2.msra.mxu0 0.0
    %300 = vmatprep.subr.mxu0 %v238
    %301 = vmatpush2.msra.mxu0 %v237
    %302 = vmatprep.subr.mxu0 %v236
    %303 = vmatpush2.msra.mxu0 %v235
    %304 = vmatprep.subr.mxu0 %v234
    %305 = vmatpush2.msra.mxu0 %v233
    %306 = vmatprep.subr.mxu0 %v232
    %307 = vmatpush2.msra.mxu0 %v231
    %308 = vmatprep.subr.mxu0 %v230
    %309 = vmatpush2.msra.mxu0 %v229
    %310 = vmatprep.subr.mxu0 %v228
    %311 = vmatpush2.msra.mxu0 %v227
    %312 = vmatprep.subr.mxu0 %v226
    %313 = vmatpush2.msra.mxu0 %v225
    %314 = vmatprep.subr.mxu0 %v224
    %315 = vmatpush2.msra.mxu0 %v223
    %316 = vmatprep.mubr.f32.mxu0 %v241
    %317 = vmatmul.mubr.f32.gmra.mxu0 %v67
    %v318 = vpop.f32.mrf.mxu0
    %v319 = vadd.f32 0.0, %v318
    %v320 = vpop.f32.mrf.mxu0
    %v321 = vadd.f32 0.0, %v320
    %322 = vmatprep.mubr.f32.mxu0 %v244
    %323 = vmatmul.mubr.f32.gmra.mxu0 %v69
    %v324 = vpop.f32.mrf.mxu0
    %v325 = vadd.f32 0.0, %v324
    %v326 = vpop.f32.mrf.mxu0
    %v327 = vadd.f32 0.0, %v326
    %328 = vmatprep.mubr.f32.mxu0 %v247
    %329 = vmatmul.mubr.f32.gmra.mxu0 %v71
    %v330 = vpop.f32.mrf.mxu0
    %v331 = vadd.f32 0.0, %v330
    %v332 = vpop.f32.mrf.mxu0
    %v333 = vadd.f32 0.0, %v332
    %334 = vmatprep.mubr.f32.mxu0 %v250
    %335 = vmatmul.mubr.f32.gmra.mxu0 %v73
    %v336 = vpop.f32.mrf.mxu0
    %v337 = vadd.f32 0.0, %v336
    %v338 = vpop.f32.mrf.mxu0
    %v339 = vadd.f32 0.0, %v338
    %340 = vdwg.mxu0
    %vm341 = vcmask 261120
    %v343 = vsel %vm341, %v187, 0
    %v346 = vsel %vm341, %v188, 0
    %v349 = vsel %vm341, %v189, 0
    %v352 = vsel %vm341, %v190, 0
    %354 = vmatprep.subr.mxu0 0.0
    %355 = vmatpush1.msra.mxu0 0.0
    %356 = vmatprep.subr.mxu0 0.0
    %357 = vmatpush1.msra.mxu0 0.0
    %358 = vmatprep.subr.mxu0 0.0
    %359 = vmatpush1.msra.mxu0 0.0
    %360 = vmatprep.subr.mxu0 0.0
    %361 = vmatpush1.msra.mxu0 0.0
    %362 = vmatprep.subr.mxu0 0.0
    %363 = vmatpush1.msra.mxu0 0.0
    %364 = vmatprep.subr.mxu0 0.0
    %365 = vmatpush1.msra.mxu0 0.0
    %366 = vmatprep.subr.mxu0 0.0
    %367 = vmatpush1.msra.mxu0 0.0
    %368 = vmatprep.subr.mxu0 0.0
    %369 = vmatpush1.msra.mxu0 0.0
    %370 = vmatprep.subr.mxu0 0.0
    %371 = vmatpush1.msra.mxu0 0.0
    %372 = vmatprep.subr.mxu0 0.0
    %373 = vmatpush1.msra.mxu0 0.0
    %374 = vmatprep.subr.mxu0 0.0
    %375 = vmatpush1.msra.mxu0 0.0
    %376 = vmatprep.subr.mxu0 0.0
    %377 = vmatpush1.msra.mxu0 0.0
    %378 = vmatprep.subr.mxu0 %v339
    %379 = vmatpush1.msra.mxu0 %v337
    %380 = vmatprep.subr.mxu0 %v333
    %381 = vmatpush1.msra.mxu0 %v331
    %382 = vmatprep.subr.mxu0 %v327
    %383 = vmatpush1.msra.mxu0 %v325
    %384 = vmatprep.subr.mxu0 %v321
    %385 = vmatpush1.msra.mxu0 %v319
    %386 = vmatprep.subr.mxu0 0.0
    %387 = vmatpush2.msra.mxu0 0.0
    %388 = vmatprep.subr.mxu0 0.0
    %389 = vmatpush2.msra.mxu0 0.0
    %390 = vmatprep.subr.mxu0 0.0
    %391 = vmatpush2.msra.mxu0 0.0
    %392 = vmatprep.subr.mxu0 0.0
    %393 = vmatpush2.msra.mxu0 0.0
    %394 = vmatprep.subr.mxu0 0.0
    %395 = vmatpush2.msra.mxu0 0.0
    %396 = vmatprep.subr.mxu0 0.0
    %397 = vmatpush2.msra.mxu0 0.0
    %398 = vmatprep.subr.mxu0 0.0
    %399 = vmatpush2.msra.mxu0 0.0
    %400 = vmatprep.subr.mxu0 0.0
    %401 = vmatpush2.msra.mxu0 0.0
    %402 = vmatprep.subr.mxu0 0.0
    %403 = vmatpush2.msra.mxu0 0.0
    %404 = vmatprep.subr.mxu0 0.0
    %405 = vmatpush2.msra.mxu0 0.0
    %406 = vmatprep.subr.mxu0 0.0
    %407 = vmatpush2.msra.mxu0 0.0
    %408 = vmatprep.subr.mxu0 0.0
    %409 = vmatpush2.msra.mxu0 0.0
    %410 = vmatprep.subr.mxu0 0.0
    %411 = vmatpush2.msra.mxu0 0.0
    %412 = vmatprep.subr.mxu0 0.0
    %413 = vmatpush2.msra.mxu0 0.0
    %414 = vmatprep.subr.mxu0 0.0
    %415 = vmatpush2.msra.mxu0 0.0
    %416 = vmatprep.subr.mxu0 0.0
    %417 = vmatpush2.msra.mxu0 0.0
    %418 = vmatprep.mubr.f32.mxu0 0.0
    %419 = vmatmul.mubr.f32.gmra.mxu0 %v343
    %v420 = vpop.f32.mrf.mxu0
    %v421 = vadd.f32 0.0, %v420
    %v422 = vpop.f32.mrf.mxu0
    %v423 = vadd.f32 0.0, %v422
    %424 = vmatprep.mubr.f32.mxu0 0.0
    %425 = vmatmul.mubr.f32.gmra.mxu0 %v346
    %v426 = vpop.f32.mrf.mxu0
    %v427 = vadd.f32 0.0, %v426
    %v428 = vpop.f32.mrf.mxu0
    %v429 = vadd.f32 0.0, %v428
    %430 = vmatprep.mubr.f32.mxu0 0.0
    %431 = vmatmul.mubr.f32.gmra.mxu0 %v349
    %v432 = vpop.f32.mrf.mxu0
    %v433 = vadd.f32 0.0, %v432
    %v434 = vpop.f32.mrf.mxu0
    %v435 = vadd.f32 0.0, %v434
    %436 = vmatprep.mubr.f32.mxu0 0.0
    %437 = vmatmul.mubr.f32.gmra.mxu0 %v352
    %v438 = vpop.f32.mrf.mxu0
    %v439 = vadd.f32 0.0, %v438
    %v440 = vpop.f32.mrf.mxu0
    %v441 = vadd.f32 0.0, %v440
    %442 = vdwg.mxu0
    %v443 = vsub.f32 %v67, %v421
    %v444 = vsub.f32 %v68, %v423
    %v445 = vsub.f32 %v69, %v427
    %v446 = vsub.f32 %v70, %v429
    %v447 = vsub.f32 %v71, %v433
    %v448 = vsub.f32 %v72, %v435
    %v449 = vsub.f32 %v73, %v439
    %v450 = vsub.f32 %v74, %v441
    %vm451 = vcmask 130048
    %v453 = vsel %vm451, %v75, 0
    %v456 = vsel %vm451, %v76, 0
    %v459 = vsel %vm451, %v77, 0
    %v462 = vsel %vm451, %v78, 0
    %464 = vmatprep.subr.mxu0 0.0
    %465 = vmatpush1.msra.mxu0 0.0
    %466 = vmatprep.subr.mxu0 0.0
    %467 = vmatpush1.msra.mxu0 0.0
    %468 = vmatprep.subr.mxu0 0.0
    %469 = vmatpush1.msra.mxu0 0.0
    %470 = vmatprep.subr.mxu0 0.0
    %471 = vmatpush1.msra.mxu0 0.0
    %472 = vmatprep.subr.mxu0 0.0
    %473 = vmatpush1.msra.mxu0 0.0
    %474 = vmatprep.subr.mxu0 0.0
    %475 = vmatpush1.msra.mxu0 0.0
    %476 = vmatprep.subr.mxu0 0.0
    %477 = vmatpush1.msra.mxu0 0.0
    %478 = vmatprep.subr.mxu0 0.0
    %479 = vmatpush1.msra.mxu0 0.0
    %480 = vmatprep.subr.mxu0 0.0
    %481 = vmatpush1.msra.mxu0 0.0
    %482 = vmatprep.subr.mxu0 0.0
    %483 = vmatpush1.msra.mxu0 0.0
    %484 = vmatprep.subr.mxu0 0.0
    %485 = vmatpush1.msra.mxu0 0.0
    %486 = vmatprep.subr.mxu0 0.0
    %487 = vmatpush1.msra.mxu0 0.0
    %488 = vmatprep.subr.mxu0 0.0
    %489 = vmatpush1.msra.mxu0 0.0
    %490 = vmatprep.subr.mxu0 0.0
    %491 = vmatpush1.msra.mxu0 0.0
    %492 = vmatprep.subr.mxu0 %v185
    %493 = vmatpush1.msra.mxu0 %v183
    %494 = vmatprep.subr.mxu0 %v179
    %495 = vmatpush1.msra.mxu0 %v177
    %496 = vmatprep.subr.mxu0 0.0
    %497 = vmatpush2.msra.mxu0 0.0
    %498 = vmatprep.subr.mxu0 0.0
    %499 = vmatpush2.msra.mxu0 0.0
    %500 = vmatprep.subr.mxu0 0.0
    %501 = vmatpush2.msra.mxu0 0.0
    %502 = vmatprep.subr.mxu0 0.0
    %503 = vmatpush2.msra.mxu0 0.0
    %504 = vmatprep.subr.mxu0 0.0
    %505 = vmatpush2.msra.mxu0 0.0
    %506 = vmatprep.subr.mxu0 0.0
    %507 = vmatpush2.msra.mxu0 0.0
    %508 = vmatprep.subr.mxu0 0.0
    %509 = vmatpush2.msra.mxu0 0.0
    %510 = vmatprep.subr.mxu0 0.0
    %511 = vmatpush2.msra.mxu0 0.0
    %512 = vmatprep.subr.mxu0 0.0
    %513 = vmatpush2.msra.mxu0 0.0
    %514 = vmatprep.subr.mxu0 0.0
    %515 = vmatpush2.msra.mxu0 0.0
    %516 = vmatprep.subr.mxu0 0.0
    %517 = vmatpush2.msra.mxu0 0.0
    %518 = vmatprep.subr.mxu0 0.0
    %519 = vmatpush2.msra.mxu0 0.0
    %520 = vmatprep.subr.mxu0 0.0
    %521 = vmatpush2.msra.mxu0 0.0
    %522 = vmatprep.subr.mxu0 0.0
    %523 = vmatpush2.msra.mxu0 0.0
    %524 = vmatprep.subr.mxu0 0.0
    %525 = vmatpush2.msra.mxu0 0.0
    %526 = vmatprep.subr.mxu0 0.0
    %527 = vmatpush2.msra.mxu0 0.0
    %528 = vmatprep.mubr.f32.mxu0 0.0
    %529 = vmatmul.mubr.f32.gmra.mxu0 %v453
    %v530 = vpop.f32.mrf.mxu0
    %v531 = vadd.f32 %v443, %v530
    %v532 = vpop.f32.mrf.mxu0
    %v533 = vadd.f32 %v444, %v532
    %534 = vmatprep.mubr.f32.mxu0 0.0
    %535 = vmatmul.mubr.f32.gmra.mxu0 %v456
    %v536 = vpop.f32.mrf.mxu0
    %v537 = vadd.f32 %v445, %v536
    %v538 = vpop.f32.mrf.mxu0
    %v539 = vadd.f32 %v446, %v538
    %540 = vmatprep.mubr.f32.mxu0 0.0
    %541 = vmatmul.mubr.f32.gmra.mxu0 %v459
    %v542 = vpop.f32.mrf.mxu0
    %v543 = vadd.f32 %v447, %v542
    %v544 = vpop.f32.mrf.mxu0
    %v545 = vadd.f32 %v448, %v544
    %546 = vmatprep.mubr.f32.mxu0 0.0
    %547 = vmatmul.mubr.f32.gmra.mxu0 %v462
    %v548 = vpop.f32.mrf.mxu0
    %v549 = vadd.f32 %v449, %v548
    %v550 = vpop.f32.mrf.mxu0
    %v551 = vadd.f32 %v450, %v550
    %552 = vdwg.mxu0
    %553 = vst [vmem:[#allocation8] sm:$0xff] %v531
    %554 = vst.msk [vmem:[#allocation8 + $0x8] sm:$0xff] %vm239, %v533
    %555 = vst [vmem:[#allocation8 + $0x10] sm:$0xff] %v537
    %556 = vst.msk [vmem:[#allocation8 + $0x18] sm:$0xff] %vm239, %v539
    %557 = vst [vmem:[#allocation8 + $0x20] sm:$0xff] %v543
    %558 = vst.msk [vmem:[#allocation8 + $0x28] sm:$0xff] %vm239, %v545
    %559 = vst [vmem:[#allocation8 + $0x30] sm:$0xff] %v549
    %560 = vst.msk [vmem:[#allocation8 + $0x38] sm:$0xff] %vm239, %v551
    // Predicated region
    $region38: #{tpu_custom_call.1} parent=1 // pred_check
      _
    $region39: #{tpu_custom_call.1} parent=1 // pred_check_branch
      %562 = sbr.rel (0) target = $region41
    $region40: #{tpu_custom_call.1} parent=1 // pred_region
      %s564 = ssub.s32 1024, 1024
      %565 = vsyncadd [#allocation4], %s564
      %s566 = sshll.u32 [#allocation8], 4
      %s567 = int_to_ptr.vmem [resolvable:$true] %s566
      %572 = dma.vmem_to_hbm [thread:$0]  %s567, 1024, %s6, [#allocation4], 256, 256, 16
    $region41: #{tpu_custom_call.1} parent=1 // pred_fallthru
      _
    // Predicated region
    $region42: #{tpu_custom_call.1} parent=1 // pred_check
      _
    $region43: #{tpu_custom_call.1} parent=1 // pred_check_branch
      %574 = sbr.rel (0) target = $region45
    $region44: #{tpu_custom_call.1} parent=1 // pred_region
      %575 = dma.done [#allocation4], 1024
    $region45: #{tpu_custom_call.1} parent=1 // pred_fallthru
      _
    %576 = vsyncpa [#allocation3], 1
    %577 = vsyncpa [#allocation6], 1
    %578 = vsyncpa [#allocation4], 1

</llo_original>
